<compile_context>
chip_gen: v7x
topology: tpu7x:2x2x1
jax: 0.10.0
libtpu: 0.0.40
codegen_flags: <defaults>
</compile_context>

<pallas_src>
import functools

import jax
import jax.numpy as jnp
from jax.experimental import pallas as pl
from jax.experimental.pallas import tpu as pltpu


# Safe across generations: v5e/v6e have 128 MiB physical VMEM, v7x has 64 MiB.
_VMEM_LIMIT = 48 * 1024 * 1024


# ----------------------------------------------------------------------------
# Tiling helper
# ----------------------------------------------------------------------------

def _tile(dim, target, align):
    """Largest legal block size <= target along `dim`.

    Legal means: equals the full dim, or is a multiple of `align`
    (16 for bf16 sublane axes, 128 for lane axes) that divides `dim` evenly
    (so the grid is even and the reduction axis needs no masking).
    """
    if dim <= target:
        return dim
    t = (target // align) * align
    while t >= align:
        if dim % t == 0:
            return t
        t -= align
    return dim  # fallback: whole dim (always legal)


# ----------------------------------------------------------------------------
# Pallas kernels
# ----------------------------------------------------------------------------

def _mask_kernel(valid_len_ref, o_ref):
    # o[b, s] = (s < valid_len[b])  — same as torch: steps < valid_length
    steps = jax.lax.broadcasted_iota(jnp.int32, o_ref.shape, 1)
    o_ref[...] = (steps < valid_len_ref[...]).astype(o_ref.dtype)


def make_text_masks(text_valid_length, seq_len):
    b = text_valid_length.shape[0]
    vl = text_valid_length.reshape(b, 1).astype(jnp.int32)
    return pl.pallas_call(
        _mask_kernel,
        out_shape=jax.ShapeDtypeStruct((b, seq_len), jnp.int32),
    )(vl)


def _dense_kernel(x_ref, w_ref, b_ref, o_ref, acc_ref, *, activation):
    @pl.when(pl.program_id(2) == 0)
    def _():
        acc_ref[...] = jnp.zeros_like(acc_ref)

    # bf16 x bf16 -> f32 accumulate on the MXU (no operand upcast).
    acc_ref[...] += jnp.dot(x_ref[...], w_ref[...],
                            preferred_element_type=jnp.float32)

    @pl.when(pl.program_id(2) == pl.num_programs(2) - 1)
    def _():
        y = acc_ref[...] + b_ref[...]           # bias in f32
        if activation == "gelu":
            y = jax.nn.gelu(y, approximate=False)
        o_ref[...] = y.astype(o_ref.dtype)


def dense(x, w, b, activation=None, *, tm=512, tn=512, tk=1024):
    """y = act(x @ w + b).  b is a precomputed (1, N) f32 bias."""
    m, k = x.shape
    kw, n = w.shape
    assert k == kw
    bm = _tile(m, tm, 16)     # bf16 packs 16 rows per vreg
    bn = _tile(n, tn, 128)
    bk = _tile(k, tk, 128)
    grid = (m // bm, n // bn, k // bk)
    return pl.pallas_call(
        functools.partial(_dense_kernel, activation=activation),
        grid_spec=pltpu.PrefetchScalarGridSpec(
            num_scalar_prefetch=0,
            grid=grid,
            in_specs=[
                pl.BlockSpec((bm, bk), lambda i, j, kk: (i, kk)),
                pl.BlockSpec((bk, bn), lambda i, j, kk: (kk, j)),
                pl.BlockSpec((1, bn), lambda i, j, kk: (0, j)),
            ],
            out_specs=pl.BlockSpec((bm, bn), lambda i, j, kk: (i, j)),
            scratch_shapes=[pltpu.VMEM((bm, bn), jnp.float32)],
        ),
        out_shape=jax.ShapeDtypeStruct((m, n), x.dtype),
        compiler_params=pltpu.CompilerParams(
            dimension_semantics=("parallel", "parallel", "arbitrary"),
            vmem_limit_bytes=_VMEM_LIMIT),
    )(x, w, b)


def _dense_add_ln_kernel(x_ref, w_ref, b_ref, r_ref, g_ref, bt_ref, o_ref,
                         acc_ref, *, eps):
    # Fused: y = LayerNorm(x @ w + b + residual).  bn == full N (one row tile).
    @pl.when(pl.program_id(1) == 0)
    def _():
        acc_ref[...] = jnp.zeros_like(acc_ref)

    acc_ref[...] += jnp.dot(x_ref[...], w_ref[...],
                            preferred_element_type=jnp.float32)

    @pl.when(pl.program_id(1) == pl.num_programs(1) - 1)
    def _():
        y = acc_ref[...] + b_ref[...] + r_ref[...].astype(jnp.float32)
        mean = jnp.mean(y, axis=-1, keepdims=True)
        var = jnp.mean(jnp.square(y - mean), axis=-1, keepdims=True)
        inv = jax.lax.rsqrt(var + eps)
        o_ref[...] = ((y - mean) * inv * g_ref[...] + bt_ref[...]
                      ).astype(o_ref.dtype)


def dense_add_layernorm(x, w, b, residual, gamma, beta, eps=1e-12,
                        *, tm=512, tk=1024):
    """LayerNorm(x @ w + b + residual) with add+LN fused into the matmul
    epilogue (saves one full (M,H) HBM write + two reads vs. a separate
    add_layernorm kernel)."""
    m, k = x.shape
    kw, n = w.shape
    assert k == kw
    bm = _tile(m, tm, 16)
    bk = _tile(k, tk, 128)
    grid = (m // bm, k // bk)   # bn == n (whole output row per tile)
    return pl.pallas_call(
        functools.partial(_dense_add_ln_kernel, eps=eps),
        grid_spec=pltpu.PrefetchScalarGridSpec(
            num_scalar_prefetch=0,
            grid=grid,
            in_specs=[
                pl.BlockSpec((bm, bk), lambda i, kk: (i, kk)),
                pl.BlockSpec((bk, n), lambda i, kk: (kk, 0)),
                pl.BlockSpec((1, n), lambda i, kk: (0, 0)),
                pl.BlockSpec((bm, n), lambda i, kk: (i, 0)),
                pl.BlockSpec((1, n), lambda i, kk: (0, 0)),
                pl.BlockSpec((1, n), lambda i, kk: (0, 0)),
            ],
            out_specs=pl.BlockSpec((bm, n), lambda i, kk: (i, 0)),
            scratch_shapes=[pltpu.VMEM((bm, n), jnp.float32)],
        ),
        out_shape=jax.ShapeDtypeStruct((m, n), x.dtype),
        compiler_params=pltpu.CompilerParams(
            dimension_semantics=("parallel", "arbitrary"),
            vmem_limit_bytes=_VMEM_LIMIT),
    )(x, w, b, residual, gamma, beta)


def _embed_ln_kernel(w_ref, t_ref, p_ref, g_ref, b_ref, o_ref, *, eps):
    # Fused word + type + position add, then LayerNorm (f32 internally).
    x = (w_ref[0].astype(jnp.float32)
         + t_ref[0].astype(jnp.float32)
         + p_ref[...].astype(jnp.float32))
    mean = jnp.mean(x, axis=-1, keepdims=True)
    var = jnp.mean(jnp.square(x - mean), axis=-1, keepdims=True)
    inv = jax.lax.rsqrt(var + eps)
    o_ref[0] = ((x - mean) * inv * g_ref[...] + b_ref[...]).astype(o_ref.dtype)


def embed_layernorm(word_e, type_e, pos_e, gamma, beta, eps=1e-12):
    b, s, h = word_e.shape
    ts = _tile(s, 512, 16)
    grid = (b, s // ts)
    return pl.pallas_call(
        functools.partial(_embed_ln_kernel, eps=eps),
        grid_spec=pltpu.PrefetchScalarGridSpec(
            num_scalar_prefetch=0,
            grid=grid,
            in_specs=[
                pl.BlockSpec((1, ts, h), lambda bi, si: (bi, si, 0)),
                pl.BlockSpec((1, ts, h), lambda bi, si: (bi, si, 0)),
                pl.BlockSpec((ts, h), lambda bi, si: (si, 0)),
                pl.BlockSpec((1, h), lambda bi, si: (0, 0)),
                pl.BlockSpec((1, h), lambda bi, si: (0, 0)),
            ],
            out_specs=pl.BlockSpec((1, ts, h), lambda bi, si: (bi, si, 0)),
        ),
        out_shape=jax.ShapeDtypeStruct((b, s, h), word_e.dtype),
        compiler_params=pltpu.CompilerParams(
            dimension_semantics=("parallel", "parallel"),
            vmem_limit_bytes=_VMEM_LIMIT),
    )(word_e, type_e, pos_e, gamma, beta)


def _attention_kernel(qkv_ref, mask_ref, o_ref, *, num_heads, scale):
    # qkv block is (1, S, 3H) bf16 in VMEM — q/k/v are static lane slices,
    # no HBM slice copies, no head-split transposes; the output is a single
    # lane-dense (S, H) block written per-head into its Dh column slice.
    qkv = qkv_ref[0]                                 # (S, 3H)
    h = qkv.shape[-1] // 3
    dh = h // num_heads
    q = qkv[:, :h]
    k = qkv[:, h:2 * h]
    v = qkv[:, 2 * h:]
    # Fold 1/sqrt(Dh) into q once (S*H muls) instead of per-head S*S muls.
    q = (q.astype(jnp.float32) * scale).astype(qkv.dtype)
    neg = (mask_ref[0].astype(jnp.float32) - 1.0) * 1e9        # (1, S) key mask
    for hi in range(num_heads):
        sl = slice(hi * dh, (hi + 1) * dh)
        # QK^T without an explicit K transpose: contract both on axis 1.
        s_scores = jax.lax.dot_general(
            q[:, sl], k[:, sl],
            dimension_numbers=(((1,), (1,)), ((), ())),
            preferred_element_type=jnp.float32)                # (S, S)
        s_scores = s_scores + neg
        s_scores = s_scores - jnp.max(s_scores, axis=-1, keepdims=True)
        p = jnp.exp(s_scores)
        inv = pl.reciprocal(jnp.sum(p, axis=-1, keepdims=True), approx=True)
        p = (p * inv).astype(v.dtype)
        # NOTE: fully padded query rows get a uniform softmax over -1e9-masked
        # scores; their outputs are never consumed by CLS/mean pooling (HF
        # behaviour) — do not start reading them.
        o_ref[0, :, sl] = jnp.dot(p, v[:, sl],
                                  preferred_element_type=jnp.float32
                                  ).astype(o_ref.dtype)


def multi_head_attention(qkv, mask_f32, *, num_heads):
    # qkv: (B, S, 3H) fused projection output; mask_f32: (B, 1, S)
    # TODO(synk): for long sequences (S >= 1024) tile the query/key axes
    # (grid=(B, S/tq, S/tk)) with an online-softmax (flash) accumulator instead
    # of the full (S, S) score matrix per head.
    b, s, h3 = qkv.shape
    h = h3 // 3
    dh = h // num_heads
    scale = 1.0 / (dh ** 0.5)
    return pl.pallas_call(
        functools.partial(_attention_kernel, num_heads=num_heads, scale=scale),
        grid_spec=pltpu.PrefetchScalarGridSpec(
            num_scalar_prefetch=0,
            grid=(b,),
            in_specs=[pl.BlockSpec((1, s, h3), lambda bi: (bi, 0, 0)),
                      pl.BlockSpec((1, 1, s), lambda bi: (bi, 0, 0))],
            out_specs=pl.BlockSpec((1, s, h), lambda bi: (bi, 0, 0)),
        ),
        out_shape=jax.ShapeDtypeStruct((b, s, h), qkv.dtype),
        compiler_params=pltpu.CompilerParams(
            dimension_semantics=("parallel",),
            vmem_limit_bytes=_VMEM_LIMIT),
    )(qkv, mask_f32)


def _mean_pool_kernel(h_ref, m_ref, o_ref):
    h = h_ref[...].astype(jnp.float32)                  # (tb, S, H)
    m = m_ref[...].astype(jnp.float32)[..., None]       # (tb, S, 1)
    summed = jnp.sum(h * m, axis=1)                     # (tb, H)
    denom = jnp.maximum(jnp.sum(m, axis=1), 1e-9)       # clamp(min=1e-9)
    o_ref[...] = (summed / denom).astype(o_ref.dtype)


def mean_pool(last_hidden_state, text_masks, *, tb=8):
    b, s, h = last_hidden_state.shape
    bb = _tile(b, tb, 8)
    grid = (b // bb,)
    return pl.pallas_call(
        _mean_pool_kernel,
        grid_spec=pltpu.PrefetchScalarGridSpec(
            num_scalar_prefetch=0,
            grid=grid,
            in_specs=[pl.BlockSpec((bb, s, h), lambda i: (i, 0, 0)),
                      pl.BlockSpec((bb, s), lambda i: (i, 0))],
            out_specs=pl.BlockSpec((bb, h), lambda i: (i, 0)),
        ),
        out_shape=jax.ShapeDtypeStruct((b, h), last_hidden_state.dtype),
        compiler_params=pltpu.CompilerParams(
            dimension_semantics=("parallel",),
            vmem_limit_bytes=_VMEM_LIMIT),
    )(last_hidden_state, text_masks)


# ----------------------------------------------------------------------------
# Synthetic backbone parameters (deterministic, no checkpoint)
# ----------------------------------------------------------------------------

def init_params(key, *, vocab_size, type_vocab_size, max_position, hidden,
                num_heads, intermediate, num_layers, num_classes):
    del num_heads  # shapes do not depend on the head count
    keys = list(jax.random.split(key, 4 + 4 * num_layers))
    ki = iter(keys)

    def w(shape):
        # matmul weights / embedding tables in bf16 for MXU-native feeds
        return (0.02 * jax.random.normal(next(ki), shape, jnp.float32)
                ).astype(jnp.bfloat16)

    def bias(n):
        # precomputed f32 (1, N) bias — no per-call reshape/convert glue
        return jnp.zeros((1, n), jnp.float32)

    params = {
        "word_emb": w((vocab_size, hidden)),
        "pos_emb": w((max_position, hidden)),
        "type_emb": w((type_vocab_size, hidden)),
        "emb_ln_g": jnp.ones((1, hidden), jnp.float32),
        "emb_ln_b": jnp.zeros((1, hidden), jnp.float32),
        "layers": [],
        "num_classes": num_classes,
    }
    for _ in range(num_layers):
        params["layers"].append(dict(
            # fused Q/K/V projection: one [H, 3H] matmul per layer
            wqkv=w((hidden, 3 * hidden)), bqkv=bias(3 * hidden),
            wo=w((hidden, hidden)), bo=bias(hidden),
            ln1_g=jnp.ones((1, hidden), jnp.float32),
            ln1_b=jnp.zeros((1, hidden), jnp.float32),
            w1=w((hidden, intermediate)), b1=bias(intermediate),
            w2=w((intermediate, hidden)), b2=bias(hidden),
            ln2_g=jnp.ones((1, hidden), jnp.float32),
            ln2_b=jnp.zeros((1, hidden), jnp.float32),
        ))
    if num_classes:
        params["head_w"] = w((hidden, num_classes))
        params["head_b"] = bias(num_classes)
    return params


# ----------------------------------------------------------------------------
# Forward pass (mirrors HFAutoModelForTextPrediction.forward)
# ----------------------------------------------------------------------------

def hf_text_prediction_forward(params, text_token_ids, text_segment_ids,
                               text_valid_length, *, num_heads,
                               pooling_mode="cls"):
    b, s = text_token_ids.shape
    hidden = params["word_emb"].shape[1]

    # text_masks = (steps < valid_length), typed as token ids (int)
    text_masks = make_text_masks(text_valid_length, s)          # (B, S) int32

    # Embedding gathers stay in glue; the 3-way add + LayerNorm is fused in
    # a single Pallas kernel (no zero residual / extra HBM pass).
    word_e = params["word_emb"][text_token_ids]                  # (B, S, H) bf16
    type_e = params["type_emb"][text_segment_ids]                # (B, S, H) bf16
    pos_e = params["pos_emb"][:s]                                # (S, H)    bf16
    x = embed_layernorm(word_e, type_e, pos_e,
                        params["emb_ln_g"], params["emb_ln_b"])  # (B, S, H)
    x = x.reshape(b * s, hidden)

    mask_f32 = text_masks.astype(jnp.float32).reshape(b, 1, s)

    for layer in params["layers"]:
        residual = x
        # Fused QKV projection; passed to attention WITHOUT slicing into
        # separate q/k/v HBM arrays.
        qkv = dense(x, layer["wqkv"], layer["bqkv"])             # (B*S, 3H)
        attn = multi_head_attention(qkv.reshape(b, s, 3 * hidden), mask_f32,
                                    num_heads=num_heads)         # (B, S, H)
        # wo projection with residual-add + LayerNorm fused in the epilogue.
        x = dense_add_layernorm(attn.reshape(b * s, hidden),
                                layer["wo"], layer["bo"],
                                residual, layer["ln1_g"], layer["ln1_b"])

        ffn_residual = x
        h1 = dense(x, layer["w1"], layer["b1"], activation="gelu")
        # w2 projection with residual-add + LayerNorm fused in the epilogue.
        x = dense_add_layernorm(h1, layer["w2"], layer["b2"],
                                ffn_residual, layer["ln2_g"], layer["ln2_b"])

    last_hidden_state = x.reshape(b, s, hidden)

    if pooling_mode == "cls":
        pooled_features = last_hidden_state[:, 0, :]
    elif pooling_mode == "mean":
        pooled_features = mean_pool(last_hidden_state, text_masks)
    else:
        raise NotImplementedError(f"Pooling mode={pooling_mode} is not supported.")

    if params["num_classes"]:
        logits = dense(pooled_features, params["head_w"], params["head_b"])
    else:
        logits = pooled_features  # nn.Identity head

    # TODO(synk): get_column_features has no column inputs here, so it returns
    # empty dicts and the module returns (pooled_features, logits).
    return pooled_features, logits


# ----------------------------------------------------------------------------
# Main
# ----------------------------------------------------------------------------

if __name__ == "__main__":
    B, S, H = 2, 8, 128
    NUM_HEADS, FFN, LAYERS = 2, 256, 2
    VOCAB, TYPE_VOCAB, MAX_POS = 100, 2, 16
    NUM_CLASSES = 3

    root = jax.random.PRNGKey(0)
    k_params, k_tok, k_seg = jax.random.split(root, 3)

    params = init_params(
        k_params, vocab_size=VOCAB, type_vocab_size=TYPE_VOCAB,
        max_position=MAX_POS, hidden=H, num_heads=NUM_HEADS,
        intermediate=FFN, num_layers=LAYERS, num_classes=NUM_CLASSES,
    )

    text_token_ids = jax.random.randint(k_tok, (B, S), 0, VOCAB, jnp.int32)
    text_segment_ids = jax.random.randint(k_seg, (B, S), 0, TYPE_VOCAB, jnp.int32)
    text_valid_length = jnp.array([5, 8], dtype=jnp.int32)

    pooled, logits = hf_text_prediction_forward(
        params, text_token_ids, text_segment_ids, text_valid_length,
        num_heads=NUM_HEADS, pooling_mode="cls",
    )
    jax.block_until_ready((pooled, logits))

    assert pooled.shape == (B, H) and logits.shape == (B, NUM_CLASSES)
    assert bool(jnp.all(jnp.isfinite(pooled.astype(jnp.float32))))
    assert bool(jnp.all(jnp.isfinite(logits.astype(jnp.float32))))

    # also exercise the mean-pooling reduction kernel
    pooled_mean, _ = hf_text_prediction_forward(
        params, text_token_ids, text_segment_ids, text_valid_length,
        num_heads=NUM_HEADS, pooling_mode="mean",
    )
    jax.block_until_ready(pooled_mean)
    assert pooled_mean.shape == (B, H)
    assert bool(jnp.all(jnp.isfinite(pooled_mean.astype(jnp.float32))))

    print("KERNEL_OK")
</pallas_src>

<mosaic_0001>
module attributes {stable_mosaic.version = 11 : i64} {
  func.func @_mask_kernel(%arg0: memref<2x1xi32, #tpu.memory_space<vmem>>, %arg1: memref<2x8xi32, #tpu.memory_space<vmem>>) attributes {dimension_semantics = [], scalar_prefetch = 0 : i64, scratch_operands = 0 : i64, tpu.core_type = #tpu.core_type<tc>} {
    %0 = tpu.iota {dimensions = array<i32: 1>} : vector<2x8xi32>
    %c0 = arith.constant 0 : index
    %c0_0 = arith.constant 0 : index
    %1 = vector.load %arg0[%c0, %c0_0] : memref<2x1xi32, #tpu.memory_space<vmem>>, vector<2x1xi32>
    %2 = vector.broadcast %1 : vector<2x1xi32> to vector<2x8xi32>
    %3 = arith.cmpi slt, %0, %2 : vector<2x8xi32>
    %4 = arith.extui %3 : vector<2x8xi1> to vector<2x8xi32>
    %c0_1 = arith.constant 0 : index
    %c0_2 = arith.constant 0 : index
    %5 = vector.load %arg1[%c0_1, %c0_2] : memref<2x8xi32, #tpu.memory_space<vmem>>, vector<2x8xi32>
    tpu.vector_store %arg1[%c0_1, %c0_2], %4 {strides = array<i32>} : memref<2x8xi32, #tpu.memory_space<vmem>>, vector<2x8xi32>,
    return
  }
}

</mosaic_0001>

<llo_original>
// kernel: tpu_custom_call.1
$region0: #{tpu_custom_call.1}
  #allocation0 [shape = 'u32[]', space=smem, size = 0x4, offset = 0x4, fixed_abs, tag = 'smem constant byte address 0x4 - core index']
  #allocation1 [shape = 'u32[144,128]{1,0:T(1,128)}', space=vmem, size = 0x12000, scoped, tag = 'internal scratch']
  %s0 = inlined_call_operand.vmem [shape: s32[2,1], index: 0, kind: input, shape index: {}]
  %s1 = inlined_call_operand.hbm [shape: s32[2,8], index: 1, kind: output, shape index: {}]
  %s2 = sld [smem:[#allocation0]]
  $region14: #{tpu_custom_call.1} parent=0
    _
  %s4 = ssub.s32 1, %s2
  %s5 = scalar_select 0, %s4, %s2
  $region1: #{tpu_custom_call.1} parent=0
    #allocation2 [shape = 'u8[1024]{0}', space=vmem, size = 0x400, scoped, tag = 'output window, operand 0, single buffered']
    #allocation3 [shape = 's32[1]{0}', space=sflag, size = 0x4, scoped, tag = 'scoped memory for tpu_custom_call.1']
    %6 = vsyncpa [#allocation3], 0
    // Predicated region
    $region2: #{tpu_custom_call.1} parent=1 // pred_check
      _
    $region3: #{tpu_custom_call.1} parent=1 // pred_check_branch
      %8 = sbr.rel (0) target = $region5
    $region4: #{tpu_custom_call.1} parent=1 // pred_region
      _
    $region5: #{tpu_custom_call.1} parent=1 // pred_fallthru
      _
    %v9 = vlaneseq
    %v10 = vand.u32 %v9, 127
    %v11 = vld [vmem:[%s0] sm:$0x3]
    %12 = vset.pattern.permute.xlu0 0
    %13 = vperm.xlu0 %12, %v11
    %v14 = vpop.permute.xlu0 %13
    %vm15 = vcmp.lt.s32.totalorder %v10, %v14
    %v16 = vsel %vm15, 1, 0
    %vm17 = vcmask 58368
    %18 = vst.msk [vmem:[#allocation2] sm:$0x3] %vm17, %v16
    // Predicated region
    $region6: #{tpu_custom_call.1} parent=1 // pred_check
      _
    $region7: #{tpu_custom_call.1} parent=1 // pred_check_branch
      %20 = sbr.rel (0) target = $region9
    $region8: #{tpu_custom_call.1} parent=1 // pred_region
      %s22 = ssub.s32 32, 32
      %23 = vsyncadd [#allocation3], %s22
      %s25 = sshll.u32 [#allocation2], 4
      %s26 = int_to_ptr.vmem [resolvable:$true] %s25
      %28 = dma.vmem_to_hbm [thread:$0]  %s26, 32, %s1, [#allocation3]
    $region9: #{tpu_custom_call.1} parent=1 // pred_fallthru
      _
    // Predicated region
    $region10: #{tpu_custom_call.1} parent=1 // pred_check
      _
    $region11: #{tpu_custom_call.1} parent=1 // pred_check_branch
      %30 = sbr.rel (0) target = $region13
    $region12: #{tpu_custom_call.1} parent=1 // pred_region
      %31 = dma.done [#allocation3], 32
    $region13: #{tpu_custom_call.1} parent=1 // pred_fallthru
      _
    %32 = vsyncpa [#allocation3], 1

</llo_original>
